<compile_context>
chip_gen: v5e
topology: v5e:2x2
jax: 0.10.0
libtpu: 0.0.40
codegen_flags: <defaults>
</compile_context>

<pallas_src>
import functools

import jax
import jax.numpy as jnp
from jax.experimental import pallas as pl
from jax.experimental.pallas import tpu as pltpu

LANES = 128
ROW_GRAN = 32          # row granularity (multiple of 8/16/32: safe for f32/bf16/int8)
MAX_TILE_ROWS = 2048   # 2048 x 128 x 4B = 1 MiB per f32 input block
ACC_ROWS = 8           # each accumulator is a single (8, 128) vreg
EPS = 1e-07            # matches the PyTorch module's smooth constant


def _detect_tpu_generation():
    """Returns (num_tensorcores_to_shard_over, is_v7x)."""
    try:
        kind = jax.devices()[0].device_kind.lower()
    except Exception:  # pragma: no cover - defensive, fall back to 1 TC
        return 1, False
    is_v7 = ("v7" in kind) or ("7x" in kind)
    return (2, True) if is_v7 else (1, False)


N_CORES, _IS_V7X = _detect_tpu_generation()
# approx EUP reciprocal only where the kernel becomes VALU-bound (v7x); exact
# f32 divide elsewhere keeps the dice term bit-close to the reference.
_APPROX_RECIP = _IS_V7X


def _round_up(x, m):
    return ((x + m - 1) // m) * m


def _bce_dice_sums_kernel(x_ref, t_ref, bce_ref, inter_ref, den_ref, *,
                          n_valid, tile_rows, steps, approx_recip):
    c = pl.program_id(0)   # core shard (CORE_PARALLEL on v7x; size 1 otherwise)
    i = pl.program_id(1)   # reduction step ("arbitrary")

    # Resident (8,128) accumulators: zero at the start of each core's loop.
    @pl.when(i == 0)
    def _init():
        bce_ref[...] = jnp.zeros_like(bce_ref)
        inter_ref[...] = jnp.zeros_like(inter_ref)
        den_ref[...] = jnp.zeros_like(den_ref)

    x = x_ref[...].astype(jnp.float32)
    t = t_ref[...].astype(jnp.float32)

    tile_elems = tile_rows * LANES
    start = (c * steps + i) * tile_elems  # global flat offset of this tile
    groups = tile_rows // ACC_ROWS

    def accumulate(x, t, valid):
        # Shared exp feeds both the BCE softplus term and the sigmoid.
        e = jnp.exp(-jnp.abs(x))
        softplus = jnp.log1p(e)
        if approx_recip:
            inv = pl.reciprocal(1.0 + e, approx=True)   # EUP op: VPU slots freed
        else:
            inv = 1.0 / (1.0 + e)
        sig = jnp.where(x >= 0.0, 1.0, e) * inv
        bce = jnp.maximum(x, 0.0) - x * t + softplus
        if valid is not None:
            bce = jnp.where(valid, bce, 0.0)
            sig = jnp.where(valid, sig, 0.0)
            t = jnp.where(valid, t, 0.0)

        # Per-step partial reduce down to one vreg.  The reshape groups 8 full
        # rows (one f32 vreg) per slice, so sum(axis=0) is a chain of
        # vreg-aligned VPU adds -- no cross-lane XLU work -- and only 3
        # accumulator loads + 3 stores hit VMEM per grid step.
        def fold(v):
            return v.reshape(groups, ACC_ROWS, LANES).sum(axis=0)

        bce_ref[0] += fold(bce)
        inter_ref[0] += fold(sig * t)
        den_ref[0] += fold(sig + t)

    # Full tiles: no masking work at all.
    @pl.when(start + tile_elems <= n_valid)
    def _full_tile():
        accumulate(x, t, None)

    # Tiles crossing n (zero-padded tail): mask via iota vs global offset.
    @pl.when(start + tile_elems > n_valid)
    def _partial_tile():
        row_idx = jax.lax.broadcasted_iota(jnp.int32, (tile_rows, LANES), 0)
        lane_idx = jax.lax.broadcasted_iota(jnp.int32, (tile_rows, LANES), 1)
        valid = (start + row_idx * LANES + lane_idx) < n_valid
        accumulate(x, t, valid)


@jax.jit
def bce_dice_loss(inputs, targets):
    """Equivalent of BCEDiceLoss(weight=None).forward(inputs, targets)."""
    n = inputs.size
    x = inputs.reshape(-1)    # dtype preserved: bf16 inputs stream at 2 B/elem
    t = targets.reshape(-1)

    # Static tiling (n is static at trace time).
    rows_raw = -(-n // LANES)
    tile_rows = min(MAX_TILE_ROWS, _round_up(-(-rows_raw // N_CORES), ROW_GRAN))
    steps = -(-rows_raw // (N_CORES * tile_rows))
    rows = N_CORES * steps * tile_rows
    pad = rows * LANES - n
    if pad:
        x = jnp.pad(x, (0, pad))
        t = jnp.pad(t, (0, pad))
    x2 = x.reshape(rows, LANES)
    t2 = t.reshape(rows, LANES)

    kernel = functools.partial(_bce_dice_sums_kernel, n_valid=n,
                               tile_rows=tile_rows, steps=steps,
                               approx_recip=_APPROX_RECIP)

    acc_shape = jax.ShapeDtypeStruct((N_CORES, ACC_ROWS, LANES), jnp.float32)
    in_spec = pl.BlockSpec((tile_rows, LANES), lambda c, i: (c * steps + i, 0))
    out_spec = pl.BlockSpec((1, ACC_ROWS, LANES), lambda c, i: (c, 0, 0))

    if N_CORES > 1:
        # Make the 2-TensorCore split real on v7x.
        dim_sem = (getattr(pltpu, "CORE_PARALLEL", "parallel"),
                   getattr(pltpu, "ARBITRARY", "arbitrary"))
    else:
        dim_sem = ("arbitrary", "arbitrary")

    out_bytes = 3 * N_CORES * ACC_ROWS * LANES * 4
    cost = pl.CostEstimate(
        flops=20 * n,
        transcendentals=3 * n,
        bytes_accessed=n * (x2.dtype.itemsize + t2.dtype.itemsize) + out_bytes)

    bce_acc, inter_acc, den_acc = pl.pallas_call(
        kernel,
        out_shape=(acc_shape, acc_shape, acc_shape),
        grid_spec=pltpu.PrefetchScalarGridSpec(
            num_scalar_prefetch=0,
            grid=(N_CORES, steps),
            in_specs=[in_spec, in_spec],
            out_specs=[out_spec, out_spec, out_spec],
        ),
        compiler_params=pltpu.CompilerParams(dimension_semantics=dim_sem),
        cost_estimate=cost,
    )(x2, t2)

    # Tiny scalar epilogue in plain JAX.
    bce_mean = jnp.sum(bce_acc) / jnp.float32(n)
    intersection = jnp.sum(inter_acc)
    denom = jnp.sum(den_acc)
    dice = (2.0 * intersection + EPS) / (denom + EPS)
    return bce_mean + (1.0 - dice)


def _reference(inputs, targets):
    x = inputs.reshape(-1).astype(jnp.float32)
    t = targets.reshape(-1).astype(jnp.float32)
    bce = jnp.mean(jnp.maximum(x, 0.0) - x * t + jnp.log1p(jnp.exp(-jnp.abs(x))))
    s = jax.nn.sigmoid(x)
    inter = jnp.sum(s * t)
    dice = (2.0 * inter + EPS) / (jnp.sum(s) + jnp.sum(t) + EPS)
    return bce + (1.0 - dice)


if __name__ == "__main__":
    key = jax.random.PRNGKey(0)
    k1, k2, k3, k4 = jax.random.split(key, 4)

    # Loosen tolerance slightly only if the approx EUP reciprocal is in use (v7x).
    tol = 1e-3 if _APPROX_RECIP else 1e-5

    # Small NCHW shapes consistent with a segmentation head.
    logits = jax.random.normal(k1, (2, 4, 16, 16), dtype=jnp.float32)
    targets = (jax.random.uniform(k2, (2, 4, 16, 16)) > 0.5).astype(jnp.float32)
    loss = bce_dice_loss(logits, targets)
    jax.block_until_ready(loss)
    ref = _reference(logits, targets)
    assert jnp.allclose(loss, ref, rtol=tol, atol=tol), (loss, ref)

    # Unaligned shape: exercises zero-padding + in-kernel tail masking.
    logits2 = jax.random.normal(k3, (2, 3, 37, 53), dtype=jnp.float32)
    targets2 = (jax.random.uniform(k4, (2, 3, 37, 53)) > 0.5).astype(jnp.float32)
    loss2 = bce_dice_loss(logits2, targets2)
    jax.block_until_ready(loss2)
    ref2 = _reference(logits2, targets2)
    assert jnp.allclose(loss2, ref2, rtol=tol, atol=tol), (loss2, ref2)

    print("KERNEL_OK")
</pallas_src>

<mosaic_0001>
module attributes {stable_mosaic.version = 11 : i64} {
  func.func @_bce_dice_sums_kernel(%arg0: i32, %arg1: i32, %arg2: memref<32x128xf32, #tpu.memory_space<vmem>>, %arg3: memref<32x128xf32, #tpu.memory_space<vmem>>, %arg4: memref<1x8x128xf32, #tpu.memory_space<vmem>>, %arg5: memref<1x8x128xf32, #tpu.memory_space<vmem>>, %arg6: memref<1x8x128xf32, #tpu.memory_space<vmem>>) attributes {dimension_semantics = [#tpu.dimension_semantics<arbitrary>, #tpu.dimension_semantics<arbitrary>], iteration_bounds = array<i64: 1, 1>, scalar_prefetch = 0 : i64, scratch_operands = 0 : i64, tpu.core_type = #tpu.core_type<tc>, window_params = [{transform_indices = @transform_0, window_bounds = array<i64: 32, 128>}, {transform_indices = @transform_1, window_bounds = array<i64: 32, 128>}, {transform_indices = @transform_2, window_bounds = array<i64: 1, 8, 128>}, {transform_indices = @transform_3, window_bounds = array<i64: 1, 8, 128>}, {transform_indices = @transform_4, window_bounds = array<i64: 1, 8, 128>}]} {
    %c0_i32 = arith.constant 0 : i32
    %0 = arith.cmpi eq, %arg1, %c0_i32 : i32
    %1 = arith.extui %0 : i1 to i32
    %c0_i32_0 = arith.constant 0 : i32
    %2 = arith.cmpi ne, %1, %c0_i32_0 : i32
    scf.if %2 {
      %cst = arith.constant 0.000000e+00 : f32
      %16 = vector.broadcast %cst : f32 to vector<1x8x128xf32>
      %c0_9 = arith.constant 0 : index
      %c0_10 = arith.constant 0 : index
      %c0_11 = arith.constant 0 : index
      %17 = vector.load %arg4[%c0_9, %c0_10, %c0_11] : memref<1x8x128xf32, #tpu.memory_space<vmem>>, vector<1x8x128xf32>
      tpu.vector_store %arg4[%c0_9, %c0_10, %c0_11], %16 {strides = array<i32>} : memref<1x8x128xf32, #tpu.memory_space<vmem>>, vector<1x8x128xf32>,
      %cst_12 = arith.constant 0.000000e+00 : f32
      %18 = vector.broadcast %cst_12 : f32 to vector<1x8x128xf32>
      %c0_13 = arith.constant 0 : index
      %c0_14 = arith.constant 0 : index
      %c0_15 = arith.constant 0 : index
      %19 = vector.load %arg5[%c0_13, %c0_14, %c0_15] : memref<1x8x128xf32, #tpu.memory_space<vmem>>, vector<1x8x128xf32>
      tpu.vector_store %arg5[%c0_13, %c0_14, %c0_15], %18 {strides = array<i32>} : memref<1x8x128xf32, #tpu.memory_space<vmem>>, vector<1x8x128xf32>,
      %cst_16 = arith.constant 0.000000e+00 : f32
      %20 = vector.broadcast %cst_16 : f32 to vector<1x8x128xf32>
      %c0_17 = arith.constant 0 : index
      %c0_18 = arith.constant 0 : index
      %c0_19 = arith.constant 0 : index
      %21 = vector.load %arg6[%c0_17, %c0_18, %c0_19] : memref<1x8x128xf32, #tpu.memory_space<vmem>>, vector<1x8x128xf32>
      tpu.vector_store %arg6[%c0_17, %c0_18, %c0_19], %20 {strides = array<i32>} : memref<1x8x128xf32, #tpu.memory_space<vmem>>, vector<1x8x128xf32>,
    } else {
    }
    %c0 = arith.constant 0 : index
    %c0_1 = arith.constant 0 : index
    %3 = vector.load %arg2[%c0, %c0_1] : memref<32x128xf32, #tpu.memory_space<vmem>>, vector<32x128xf32>
    %c0_2 = arith.constant 0 : index
    %c0_3 = arith.constant 0 : index
    %4 = vector.load %arg3[%c0_2, %c0_3] : memref<32x128xf32, #tpu.memory_space<vmem>>, vector<32x128xf32>
    %c1_i32 = arith.constant 1 : i32
    %5 = arith.muli %arg0, %c1_i32 : i32
    %6 = arith.addi %5, %arg1 : i32
    %c4096_i32 = arith.constant 4096 : i32
    %7 = arith.muli %6, %c4096_i32 : i32
    %c4096_i32_4 = arith.constant 4096 : i32
    %8 = arith.addi %7, %c4096_i32_4 : i32
    %c2048_i32 = arith.constant 2048 : i32
    %9 = arith.cmpi sle, %8, %c2048_i32 : i32
    %10 = arith.extui %9 : i1 to i32
    %c0_i32_5 = arith.constant 0 : i32
    %11 = arith.cmpi ne, %10, %c0_i32_5 : i32
    scf.if %11 {
      %16 = math.absf %3 : vector<32x128xf32>
      %cst = arith.constant 0.000000e+00 : f32
      %17 = vector.broadcast %cst : f32 to vector<32x128xf32>
      %18 = arith.subf %17, %16 : vector<32x128xf32>
      %19 = math.exp %18 : vector<32x128xf32>
      %20 = math.log1p %19 : vector<32x128xf32>
      %cst_9 = arith.constant 1.000000e+00 : f32
      %21 = vector.broadcast %cst_9 : f32 to vector<32x128xf32>
      %22 = arith.addf %21, %19 : vector<32x128xf32>
      %cst_10 = arith.constant 1.000000e+00 : f32
      %23 = vector.broadcast %cst_10 : f32 to vector<32x128xf32>
      %24 = arith.divf %23, %22 : vector<32x128xf32>
      %cst_11 = arith.constant 0.000000e+00 : f32
      %25 = vector.broadcast %cst_11 : f32 to vector<32x128xf32>
      %26 = arith.cmpf oge, %3, %25 : vector<32x128xf32>
      %cst_12 = arith.constant 1.000000e+00 : f32
      %27 = vector.broadcast %cst_12 : f32 to vector<32x128xf32>
      %28 = arith.select %26, %27, %19 : vector<32x128xi1>, vector<32x128xf32>
      %29 = arith.mulf %28, %24 : vector<32x128xf32>
      %cst_13 = arith.constant 0.000000e+00 : f32
      %30 = vector.broadcast %cst_13 : f32 to vector<32x128xf32>
      %31 = arith.maximumf %3, %30 : vector<32x128xf32>
      %32 = arith.mulf %3, %4 : vector<32x128xf32>
      %33 = arith.subf %31, %32 : vector<32x128xf32>
      %34 = arith.addf %33, %20 : vector<32x128xf32>
      %c0_14 = arith.constant 0 : index
      %c0_15 = arith.constant 0 : index
      %c0_16 = arith.constant 0 : index
      %35 = vector.load %arg4[%c0_14, %c0_15, %c0_16] : memref<1x8x128xf32, #tpu.memory_space<vmem>>, vector<1x8x128xf32>
      %36 = vector.shape_cast %35 : vector<1x8x128xf32> to vector<8x128xf32>
      %37 = vector.shape_cast %34 : vector<32x128xf32> to vector<4x8x128xf32>
      %cst_17 = arith.constant dense<0.000000e+00> : vector<8x128xf32>
      %38 = vector.multi_reduction <add>, %37, %cst_17 [0] : vector<4x8x128xf32> to vector<8x128xf32>
      %39 = arith.addf %36, %38 : vector<8x128xf32>
      %c0_18 = arith.constant 0 : index
      %c0_19 = arith.constant 0 : index
      %c0_20 = arith.constant 0 : index
      %40 = vector.load %arg4[%c0_18, %c0_19, %c0_20] : memref<1x8x128xf32, #tpu.memory_space<vmem>>, vector<1x8x128xf32>
      %41 = vector.shape_cast %40 : vector<1x8x128xf32> to vector<8x128xf32>
      %42 = vector.shape_cast %39 : vector<8x128xf32> to vector<1x8x128xf32>
      tpu.vector_store %arg4[%c0_18, %c0_19, %c0_20], %42 {strides = array<i32>} : memref<1x8x128xf32, #tpu.memory_space<vmem>>, vector<1x8x128xf32>,
      %c0_21 = arith.constant 0 : index
      %c0_22 = arith.constant 0 : index
      %c0_23 = arith.constant 0 : index
      %43 = vector.load %arg5[%c0_21, %c0_22, %c0_23] : memref<1x8x128xf32, #tpu.memory_space<vmem>>, vector<1x8x128xf32>
      %44 = vector.shape_cast %43 : vector<1x8x128xf32> to vector<8x128xf32>
      %45 = arith.mulf %29, %4 : vector<32x128xf32>
      %46 = vector.shape_cast %45 : vector<32x128xf32> to vector<4x8x128xf32>
      %cst_24 = arith.constant dense<0.000000e+00> : vector<8x128xf32>
      %47 = vector.multi_reduction <add>, %46, %cst_24 [0] : vector<4x8x128xf32> to vector<8x128xf32>
      %48 = arith.addf %44, %47 : vector<8x128xf32>
      %c0_25 = arith.constant 0 : index
      %c0_26 = arith.constant 0 : index
      %c0_27 = arith.constant 0 : index
      %49 = vector.load %arg5[%c0_25, %c0_26, %c0_27] : memref<1x8x128xf32, #tpu.memory_space<vmem>>, vector<1x8x128xf32>
      %50 = vector.shape_cast %49 : vector<1x8x128xf32> to vector<8x128xf32>
      %51 = vector.shape_cast %48 : vector<8x128xf32> to vector<1x8x128xf32>
      tpu.vector_store %arg5[%c0_25, %c0_26, %c0_27], %51 {strides = array<i32>} : memref<1x8x128xf32, #tpu.memory_space<vmem>>, vector<1x8x128xf32>,
      %c0_28 = arith.constant 0 : index
      %c0_29 = arith.constant 0 : index
      %c0_30 = arith.constant 0 : index
      %52 = vector.load %arg6[%c0_28, %c0_29, %c0_30] : memref<1x8x128xf32, #tpu.memory_space<vmem>>, vector<1x8x128xf32>
      %53 = vector.shape_cast %52 : vector<1x8x128xf32> to vector<8x128xf32>
      %54 = arith.addf %29, %4 : vector<32x128xf32>
      %55 = vector.shape_cast %54 : vector<32x128xf32> to vector<4x8x128xf32>
      %cst_31 = arith.constant dense<0.000000e+00> : vector<8x128xf32>
      %56 = vector.multi_reduction <add>, %55, %cst_31 [0] : vector<4x8x128xf32> to vector<8x128xf32>
      %57 = arith.addf %53, %56 : vector<8x128xf32>
      %c0_32 = arith.constant 0 : index
      %c0_33 = arith.constant 0 : index
      %c0_34 = arith.constant 0 : index
      %58 = vector.load %arg6[%c0_32, %c0_33, %c0_34] : memref<1x8x128xf32, #tpu.memory_space<vmem>>, vector<1x8x128xf32>
      %59 = vector.shape_cast %58 : vector<1x8x128xf32> to vector<8x128xf32>
      %60 = vector.shape_cast %57 : vector<8x128xf32> to vector<1x8x128xf32>
      tpu.vector_store %arg6[%c0_32, %c0_33, %c0_34], %60 {strides = array<i32>} : memref<1x8x128xf32, #tpu.memory_space<vmem>>, vector<1x8x128xf32>,
    } else {
    }
    %c4096_i32_6 = arith.constant 4096 : i32
    %12 = arith.addi %7, %c4096_i32_6 : i32
    %c2048_i32_7 = arith.constant 2048 : i32
    %13 = arith.cmpi sgt, %12, %c2048_i32_7 : i32
    %14 = arith.extui %13 : i1 to i32
    %c0_i32_8 = arith.constant 0 : i32
    %15 = arith.cmpi ne, %14, %c0_i32_8 : i32
    scf.if %15 {
      %16 = tpu.iota {dimensions = array<i32: 0>} : vector<32x128xi32>
      %17 = tpu.iota {dimensions = array<i32: 1>} : vector<32x128xi32>
      %c128_i32 = arith.constant 128 : i32
      %18 = vector.broadcast %c128_i32 : i32 to vector<32x128xi32>
      %19 = arith.muli %16, %18 : vector<32x128xi32>
      %20 = vector.broadcast %7 : i32 to vector<32x128xi32>
      %21 = arith.addi %20, %19 : vector<32x128xi32>
      %22 = arith.addi %21, %17 : vector<32x128xi32>
      %c2048_i32_9 = arith.constant 2048 : i32
      %23 = vector.broadcast %c2048_i32_9 : i32 to vector<32x128xi32>
      %24 = arith.cmpi slt, %22, %23 : vector<32x128xi32>
      %25 = math.absf %3 : vector<32x128xf32>
      %cst = arith.constant 0.000000e+00 : f32
      %26 = vector.broadcast %cst : f32 to vector<32x128xf32>
      %27 = arith.subf %26, %25 : vector<32x128xf32>
      %28 = math.exp %27 : vector<32x128xf32>
      %29 = math.log1p %28 : vector<32x128xf32>
      %cst_10 = arith.constant 1.000000e+00 : f32
      %30 = vector.broadcast %cst_10 : f32 to vector<32x128xf32>
      %31 = arith.addf %30, %28 : vector<32x128xf32>
      %cst_11 = arith.constant 1.000000e+00 : f32
      %32 = vector.broadcast %cst_11 : f32 to vector<32x128xf32>
      %33 = arith.divf %32, %31 : vector<32x128xf32>
      %cst_12 = arith.constant 0.000000e+00 : f32
      %34 = vector.broadcast %cst_12 : f32 to vector<32x128xf32>
      %35 = arith.cmpf oge, %3, %34 : vector<32x128xf32>
      %cst_13 = arith.constant 1.000000e+00 : f32
      %36 = vector.broadcast %cst_13 : f32 to vector<32x128xf32>
      %37 = arith.select %35, %36, %28 : vector<32x128xi1>, vector<32x128xf32>
      %38 = arith.mulf %37, %33 : vector<32x128xf32>
      %cst_14 = arith.constant 0.000000e+00 : f32
      %39 = vector.broadcast %cst_14 : f32 to vector<32x128xf32>
      %40 = arith.maximumf %3, %39 : vector<32x128xf32>
      %41 = arith.mulf %3, %4 : vector<32x128xf32>
      %42 = arith.subf %40, %41 : vector<32x128xf32>
      %43 = arith.addf %42, %29 : vector<32x128xf32>
      %cst_15 = arith.constant 0.000000e+00 : f32
      %44 = vector.broadcast %cst_15 : f32 to vector<32x128xf32>
      %45 = arith.select %24, %43, %44 : vector<32x128xi1>, vector<32x128xf32>
      %cst_16 = arith.constant 0.000000e+00 : f32
      %46 = vector.broadcast %cst_16 : f32 to vector<32x128xf32>
      %47 = arith.select %24, %38, %46 : vector<32x128xi1>, vector<32x128xf32>
      %cst_17 = arith.constant 0.000000e+00 : f32
      %48 = vector.broadcast %cst_17 : f32 to vector<32x128xf32>
      %49 = arith.select %24, %4, %48 : vector<32x128xi1>, vector<32x128xf32>
      %c0_18 = arith.constant 0 : index
      %c0_19 = arith.constant 0 : index
      %c0_20 = arith.constant 0 : index
      %50 = vector.load %arg4[%c0_18, %c0_19, %c0_20] : memref<1x8x128xf32, #tpu.memory_space<vmem>>, vector<1x8x128xf32>
      %51 = vector.shape_cast %50 : vector<1x8x128xf32> to vector<8x128xf32>
      %52 = vector.shape_cast %45 : vector<32x128xf32> to vector<4x8x128xf32>
      %cst_21 = arith.constant dense<0.000000e+00> : vector<8x128xf32>
      %53 = vector.multi_reduction <add>, %52, %cst_21 [0] : vector<4x8x128xf32> to vector<8x128xf32>
      %54 = arith.addf %51, %53 : vector<8x128xf32>
      %c0_22 = arith.constant 0 : index
      %c0_23 = arith.constant 0 : index
      %c0_24 = arith.constant 0 : index
      %55 = vector.load %arg4[%c0_22, %c0_23, %c0_24] : memref<1x8x128xf32, #tpu.memory_space<vmem>>, vector<1x8x128xf32>
      %56 = vector.shape_cast %55 : vector<1x8x128xf32> to vector<8x128xf32>
      %57 = vector.shape_cast %54 : vector<8x128xf32> to vector<1x8x128xf32>
      tpu.vector_store %arg4[%c0_22, %c0_23, %c0_24], %57 {strides = array<i32>} : memref<1x8x128xf32, #tpu.memory_space<vmem>>, vector<1x8x128xf32>,
      %c0_25 = arith.constant 0 : index
      %c0_26 = arith.constant 0 : index
      %c0_27 = arith.constant 0 : index
      %58 = vector.load %arg5[%c0_25, %c0_26, %c0_27] : memref<1x8x128xf32, #tpu.memory_space<vmem>>, vector<1x8x128xf32>
      %59 = vector.shape_cast %58 : vector<1x8x128xf32> to vector<8x128xf32>
      %60 = arith.mulf %47, %49 : vector<32x128xf32>
      %61 = vector.shape_cast %60 : vector<32x128xf32> to vector<4x8x128xf32>
      %cst_28 = arith.constant dense<0.000000e+00> : vector<8x128xf32>
      %62 = vector.multi_reduction <add>, %61, %cst_28 [0] : vector<4x8x128xf32> to vector<8x128xf32>
      %63 = arith.addf %59, %62 : vector<8x128xf32>
      %c0_29 = arith.constant 0 : index
      %c0_30 = arith.constant 0 : index
      %c0_31 = arith.constant 0 : index
      %64 = vector.load %arg5[%c0_29, %c0_30, %c0_31] : memref<1x8x128xf32, #tpu.memory_space<vmem>>, vector<1x8x128xf32>
      %65 = vector.shape_cast %64 : vector<1x8x128xf32> to vector<8x128xf32>
      %66 = vector.shape_cast %63 : vector<8x128xf32> to vector<1x8x128xf32>
      tpu.vector_store %arg5[%c0_29, %c0_30, %c0_31], %66 {strides = array<i32>} : memref<1x8x128xf32, #tpu.memory_space<vmem>>, vector<1x8x128xf32>,
      %c0_32 = arith.constant 0 : index
      %c0_33 = arith.constant 0 : index
      %c0_34 = arith.constant 0 : index
      %67 = vector.load %arg6[%c0_32, %c0_33, %c0_34] : memref<1x8x128xf32, #tpu.memory_space<vmem>>, vector<1x8x128xf32>
      %68 = vector.shape_cast %67 : vector<1x8x128xf32> to vector<8x128xf32>
      %69 = arith.addf %47, %49 : vector<32x128xf32>
      %70 = vector.shape_cast %69 : vector<32x128xf32> to vector<4x8x128xf32>
      %cst_35 = arith.constant dense<0.000000e+00> : vector<8x128xf32>
      %71 = vector.multi_reduction <add>, %70, %cst_35 [0] : vector<4x8x128xf32> to vector<8x128xf32>
      %72 = arith.addf %68, %71 : vector<8x128xf32>
      %c0_36 = arith.constant 0 : index
      %c0_37 = arith.constant 0 : index
      %c0_38 = arith.constant 0 : index
      %73 = vector.load %arg6[%c0_36, %c0_37, %c0_38] : memref<1x8x128xf32, #tpu.memory_space<vmem>>, vector<1x8x128xf32>
      %74 = vector.shape_cast %73 : vector<1x8x128xf32> to vector<8x128xf32>
      %75 = vector.shape_cast %72 : vector<8x128xf32> to vector<1x8x128xf32>
      tpu.vector_store %arg6[%c0_36, %c0_37, %c0_38], %75 {strides = array<i32>} : memref<1x8x128xf32, #tpu.memory_space<vmem>>, vector<1x8x128xf32>,
    } else {
    }
    return
  }
  func.func @transform_0(%arg0: i32, %arg1: i32) -> (i32, i32) {
    %c1_i32 = arith.constant 1 : i32
    %0 = arith.muli %arg0, %c1_i32 : i32
    %1 = arith.addi %0, %arg1 : i32
    %c0_i32 = arith.constant 0 : i32
    %c0_i32_0 = arith.constant 0 : i32
    return %1, %c0_i32 : i32, i32
  }
  func.func @transform_1(%arg0: i32, %arg1: i32) -> (i32, i32) {
    %c1_i32 = arith.constant 1 : i32
    %0 = arith.muli %arg0, %c1_i32 : i32
    %1 = arith.addi %0, %arg1 : i32
    %c0_i32 = arith.constant 0 : i32
    %c0_i32_0 = arith.constant 0 : i32
    return %1, %c0_i32 : i32, i32
  }
  func.func @transform_2(%arg0: i32, %arg1: i32) -> (i32, i32, i32) {
    %c0_i32 = arith.constant 0 : i32
    %c0_i32_0 = arith.constant 0 : i32
    %c0_i32_1 = arith.constant 0 : i32
    return %arg0, %c0_i32, %c0_i32_0 : i32, i32, i32
  }
  func.func @transform_3(%arg0: i32, %arg1: i32) -> (i32, i32, i32) {
    %c0_i32 = arith.constant 0 : i32
    %c0_i32_0 = arith.constant 0 : i32
    %c0_i32_1 = arith.constant 0 : i32
    return %arg0, %c0_i32, %c0_i32_0 : i32, i32, i32
  }
  func.func @transform_4(%arg0: i32, %arg1: i32) -> (i32, i32, i32) {
    %c0_i32 = arith.constant 0 : i32
    %c0_i32_0 = arith.constant 0 : i32
    %c0_i32_1 = arith.constant 0 : i32
    return %arg0, %c0_i32, %c0_i32_0 : i32, i32, i32
  }
}

</mosaic_0001>

<llo_original>
// kernel: bce_dice_loss.1
$region0: #{bce_dice_loss.1}
  #allocation0 [shape = 'u32[]', space=smem, size = 0x4, offset = 0x4, fixed_abs, tag = 'smem constant byte address 0x4 - core index']
  #allocation1 [shape = 'u32[72,128]{1,0:T(1,128)}', space=vmem, size = 0x9000, scoped, tag = 'internal scratch']
  %s0 = inlined_call_operand.vmem [shape: f32[32,128], index: 0, kind: input, shape index: {}]
  %s1 = inlined_call_operand.vmem [shape: f32[32,128], index: 1, kind: input, shape index: {}]
  %s2 = inlined_call_operand.vmem [shape: f32[1,8,128], index: 2, kind: output, shape index: {0}]
  %s3 = inlined_call_operand.vmem [shape: f32[1,8,128], index: 3, kind: output, shape index: {1}]
  %s4 = inlined_call_operand.vmem [shape: f32[1,8,128], index: 4, kind: output, shape index: {2}]
  %5 = xla_tuple %s2, %s3, %s4
  %s6 = sld [smem:[#allocation0]]
  $region46: #{bce_dice_loss.1} parent=0
    _
  %s8 = ssub.s32 1, %s6
  %s9 = scalar_select 0, %s8, %s6
  // Predicated region
  $region2: #{bce_dice_loss.1} parent=0 // pred_check
    _
  $region3: #{bce_dice_loss.1} parent=0 // pred_check_branch
    %11 = sbr.rel (0) target = $region5
  $region4: #{bce_dice_loss.1} parent=0 // pred_region
    %s12 = sadd.s32 0, 0
    %s13 = smul.u32 4, %s12
    %p14 = scmp.lt.s32.totalorder %s13, 3
    %s15 = scalar_select %p14, %s13, 3
    %s16 = smul.addr %s15, 8
    %s17 = scalar_lea.vmem %s0, %s16
    %s18 = sadd.s32 0, 0
    %s19 = smul.u32 4, %s18
  $region5: #{bce_dice_loss.1} parent=0 // pred_fallthru
    _
  // Predicated region
  $region6: #{bce_dice_loss.1} parent=0 // pred_check
    _
  $region7: #{bce_dice_loss.1} parent=0 // pred_check_branch
    %21 = sbr.rel (0) target = $region9
  $region8: #{bce_dice_loss.1} parent=0 // pred_region
    %s22 = sadd.s32 0, 0
    %s23 = smul.u32 4, %s22
    %p24 = scmp.lt.s32.totalorder %s23, 3
    %s25 = scalar_select %p24, %s23, 3
    %s26 = smul.addr %s25, 8
    %s27 = scalar_lea.vmem %s1, %s26
    %s28 = sadd.s32 0, 0
    %s29 = smul.u32 4, %s28
  $region9: #{bce_dice_loss.1} parent=0 // pred_fallthru
    _
  %s30 = sadd.s32 0, 0
  %s31 = smul.u32 4, %s30
  %p32 = scmp.lt.s32.totalorder %s31, 3
  %s33 = scalar_select %p32, %s31, 3
  %s34 = smul.addr %s33, 8
  %s35 = scalar_lea.vmem %s0, %s34
  %s36 = sadd.s32 0, 0
  %s37 = smul.u32 4, %s36
  %p38 = scmp.lt.s32.totalorder %s37, 3
  %s39 = scalar_select %p38, %s37, 3
  %s40 = smul.addr %s39, 8
  %s41 = scalar_lea.vmem %s1, %s40
  %s42 = sadd.s32 0, 0
  %s43 = smul.u32 4, %s42
  %p44 = scmp.lt.s32.totalorder %s43, 3
  %s45 = scalar_select %p44, %s43, 3
  %s46 = smul.addr %s45, 8
  %s47 = scalar_lea.vmem %s0, %s46
  %s48 = sadd.s32 0, 0
  %s49 = smul.u32 4, %s48
  %s50 = sadd.s32 0, 0
  %s51 = smul.u32 4, %s50
  %p52 = scmp.lt.s32.totalorder %s51, 3
  %s53 = scalar_select %p52, %s51, 3
  %s54 = smul.addr %s53, 8
  %s55 = scalar_lea.vmem %s1, %s54
  %s56 = sadd.s32 0, 0
  %s57 = smul.u32 4, %s56
  %p58 = scmp.eq.s32.totalorder 0, 0
  // Predicated region
  $region10: #{bce_dice_loss.1} parent=0 // pred_check
    %p59 = pneg %p58
  $region11: #{bce_dice_loss.1} parent=0 // pred_check_branch
    %61 = sbr.rel (%p59) target = $region13
  $region12: #{bce_dice_loss.1} parent=0 // pred_region
    %62 = vst [vmem:[%s2] sm:$0xff] 0.0
    %63 = vst [vmem:[%s3] sm:$0xff] 0.0
    %64 = vst [vmem:[%s4] sm:$0xff] 0.0
  $region13: #{bce_dice_loss.1} parent=0 // pred_fallthru
    _
  %v65 = vld [vmem:[%s47] sm:$0xff]
  %v66 = vld [vmem:[%s47 + $0x8] sm:$0xff]
  %v67 = vld [vmem:[%s47 + $0x10] sm:$0xff]
  %v68 = vld [vmem:[%s47 + $0x18] sm:$0xff]
  %v69 = vld [vmem:[%s55] sm:$0xff]
  %v70 = vld [vmem:[%s55 + $0x8] sm:$0xff]
  %v71 = vld [vmem:[%s55 + $0x10] sm:$0xff]
  %v72 = vld [vmem:[%s55 + $0x18] sm:$0xff]
  %s73 = sadd.s32 0, 0
  %s74 = smul.u32 %s73, 4096
  %s75 = sadd.s32 %s74, 4096
  %p76 = scmp.le.s32.totalorder %s75, 2048
  // Predicated region
  $region14: #{bce_dice_loss.1} parent=0 // pred_check
    %p77 = pneg %p76
  $region15: #{bce_dice_loss.1} parent=0 // pred_check_branch
    %79 = sbr.rel (%p77) target = $region17
  $region16: #{bce_dice_loss.1} parent=0 // pred_region
    %v80 = vand.u32 2147483647, %v65
    %v81 = vand.u32 2147483647, %v66
    %v82 = vand.u32 2147483647, %v67
    %v83 = vand.u32 2147483647, %v68
    %v84 = vsub.f32 0.0, %v80
    %v85 = vsub.f32 0.0, %v81
    %v86 = vsub.f32 0.0, %v82
    %v87 = vsub.f32 0.0, %v83
    %v88 = vmul.f32 %v84, 1.442695
    %v89 = vpow.pop %v88
    %v90 = vmul.f32 %v85, 1.442695
    %v91 = vpow.pop %v90
    %v92 = vmul.f32 %v86, 1.442695
    %v93 = vpow.pop %v92
    %v94 = vmul.f32 %v87, 1.442695
    %v95 = vpow.pop %v94
    %v96 = vadd.f32 %v89, 1.0
    %v97 = vlog2.pop %v96
    %v98 = vmul.f32 %v97, 0.6931472
    %v99 = vmul.f32 -0.5, %v89
    %v100 = vadd.f32 %v99, 1.0
    %v101 = vmul.f32 %v100, %v89
    %v102 = vand.u32 2147483647, %v89
    %vm103 = vcmp.lt.f32.partialorder %v102, 0.0004427343
    %v104 = vsel %vm103, %v101, %v98
    %v105 = vadd.f32 %v91, 1.0
    %v106 = vlog2.pop %v105
    %v107 = vmul.f32 %v106, 0.6931472
    %v108 = vmul.f32 -0.5, %v91
    %v109 = vadd.f32 %v108, 1.0
    %v110 = vmul.f32 %v109, %v91
    %v111 = vand.u32 2147483647, %v91
    %vm112 = vcmp.lt.f32.partialorder %v111, 0.0004427343
    %v113 = vsel %vm112, %v110, %v107
    %v114 = vadd.f32 %v93, 1.0
    %v115 = vlog2.pop %v114
    %v116 = vmul.f32 %v115, 0.6931472
    %v117 = vmul.f32 -0.5, %v93
    %v118 = vadd.f32 %v117, 1.0
    %v119 = vmul.f32 %v118, %v93
    %v120 = vand.u32 2147483647, %v93
    %vm121 = vcmp.lt.f32.partialorder %v120, 0.0004427343
    %v122 = vsel %vm121, %v119, %v116
    %v123 = vadd.f32 %v95, 1.0
    %v124 = vlog2.pop %v123
    %v125 = vmul.f32 %v124, 0.6931472
    %v126 = vmul.f32 -0.5, %v95
    %v127 = vadd.f32 %v126, 1.0
    %v128 = vmul.f32 %v127, %v95
    %v129 = vand.u32 2147483647, %v95
    %vm130 = vcmp.lt.f32.partialorder %v129, 0.0004427343
    %v131 = vsel %vm130, %v128, %v125
    %v132 = vadd.f32 %v89, 1.0
    %v133 = vadd.f32 %v91, 1.0
    %v134 = vadd.f32 %v93, 1.0
    %v135 = vadd.f32 %v95, 1.0
    %v136 = vrcp.pop %v132
    %v137 = vmul.f32 %v132, %v136
    %v138 = vsub.f32 1.0, %v137
    %v139 = vmul.f32 %v136, %v138
    %v140 = vadd.f32 %v136, %v139
    %vm141 = vweird.f32 %v132
    %vm142 = vweird.f32 %v136
    %vm143 = vmor %vm141, %vm142
    %v144 = vsel %vm143, %v136, %v140
    %v145 = vand.u32 2147483647, %v132
    %vm146 = vcmp.eq.f32.partialorder %v145, 8.507059e+37
    %v147 = vand.u32 %v132, 2147483648
    %v148 = vor.u32 1.1754944e-38, %v147
    %v149 = vsel %vm146, %v148, %v144
    %v150 = vmul.f32 1.0, %v149
    %v151 = vrcp.pop %v133
    %v152 = vmul.f32 %v133, %v151
    %v153 = vsub.f32 1.0, %v152
    %v154 = vmul.f32 %v151, %v153
    %v155 = vadd.f32 %v151, %v154
    %vm156 = vweird.f32 %v133
    %vm157 = vweird.f32 %v151
    %vm158 = vmor %vm156, %vm157
    %v159 = vsel %vm158, %v151, %v155
    %v160 = vand.u32 2147483647, %v133
    %vm161 = vcmp.eq.f32.partialorder %v160, 8.507059e+37
    %v162 = vand.u32 %v133, 2147483648
    %v163 = vor.u32 1.1754944e-38, %v162
    %v164 = vsel %vm161, %v163, %v159
    %v165 = vmul.f32 1.0, %v164
    %v166 = vrcp.pop %v134
    %v167 = vmul.f32 %v134, %v166
    %v168 = vsub.f32 1.0, %v167
    %v169 = vmul.f32 %v166, %v168
    %v170 = vadd.f32 %v166, %v169
    %vm171 = vweird.f32 %v134
    %vm172 = vweird.f32 %v166
    %vm173 = vmor %vm171, %vm172
    %v174 = vsel %vm173, %v166, %v170
    %v175 = vand.u32 2147483647, %v134
    %vm176 = vcmp.eq.f32.partialorder %v175, 8.507059e+37
    %v177 = vand.u32 %v134, 2147483648
    %v178 = vor.u32 1.1754944e-38, %v177
    %v179 = vsel %vm176, %v178, %v174
    %v180 = vmul.f32 1.0, %v179
    %v181 = vrcp.pop %v135
    %v182 = vmul.f32 %v135, %v181
    %v183 = vsub.f32 1.0, %v182
    %v184 = vmul.f32 %v181, %v183
    %v185 = vadd.f32 %v181, %v184
    %vm186 = vweird.f32 %v135
    %vm187 = vweird.f32 %v181
    %vm188 = vmor %vm186, %vm187
    %v189 = vsel %vm188, %v181, %v185
    %v190 = vand.u32 2147483647, %v135
    %vm191 = vcmp.eq.f32.partialorder %v190, 8.507059e+37
    %v192 = vand.u32 %v135, 2147483648
    %v193 = vor.u32 1.1754944e-38, %v192
    %v194 = vsel %vm191, %v193, %v189
    %v195 = vmul.f32 1.0, %v194
    %vm196 = vcmp.ge.f32.partialorder %v65, 0.0
    %vm197 = vcmp.ge.f32.partialorder %v66, 0.0
    %vm198 = vcmp.ge.f32.partialorder %v67, 0.0
    %vm199 = vcmp.ge.f32.partialorder %v68, 0.0
    %v200 = vsel %vm196, 1.0, %v89
    %v201 = vsel %vm197, 1.0, %v91
    %v202 = vsel %vm198, 1.0, %v93
    %v203 = vsel %vm199, 1.0, %v95
    %v204 = vmul.f32 %v200, %v150
    %v205 = vmul.f32 %v201, %v165
    %v206 = vmul.f32 %v202, %v180
    %v207 = vmul.f32 %v203, %v195
    %v208 = vmax.f32 %v65, 0.0
    %v209 = vmax.f32 %v66, 0.0
    %v210 = vmax.f32 %v67, 0.0
    %v211 = vmax.f32 %v68, 0.0
    %v212 = vmul.f32 %v65, %v69
    %v213 = vmul.f32 %v66, %v70
    %v214 = vmul.f32 %v67, %v71
    %v215 = vmul.f32 %v68, %v72
    %v216 = vsub.f32 %v208, %v212
    %v217 = vsub.f32 %v209, %v213
    %v218 = vsub.f32 %v210, %v214
    %v219 = vsub.f32 %v211, %v215
    %v220 = vadd.f32 %v216, %v104
    %v221 = vadd.f32 %v217, %v113
    %v222 = vadd.f32 %v218, %v122
    %v223 = vadd.f32 %v219, %v131
    %v224 = vld [vmem:[%s2] sm:$0xff]
    %v225 = vadd.f32 %v220, %v221
    %v226 = vadd.f32 %v225, %v222
    %v227 = vadd.f32 %v226, %v223
    %v228 = vadd.f32 %v224, %v227
    %229 = vst [vmem:[%s2] sm:$0xff] %v228
    %v230 = vld [vmem:[%s3] sm:$0xff]
    %v231 = vmul.f32 %v204, %v69
    %v232 = vmul.f32 %v205, %v70
    %v233 = vmul.f32 %v206, %v71
    %v234 = vmul.f32 %v207, %v72
    %v235 = vadd.f32 %v231, %v232
    %v236 = vadd.f32 %v235, %v233
    %v237 = vadd.f32 %v236, %v234
    %v238 = vadd.f32 %v230, %v237
    %239 = vst [vmem:[%s3] sm:$0xff] %v238
    %v240 = vld [vmem:[%s4] sm:$0xff]
    %v241 = vadd.f32 %v204, %v69
    %v242 = vadd.f32 %v205, %v70
    %v243 = vadd.f32 %v206, %v71
    %v244 = vadd.f32 %v207, %v72
    %v245 = vadd.f32 %v241, %v242
    %v246 = vadd.f32 %v245, %v243
    %v247 = vadd.f32 %v246, %v244
    %v248 = vadd.f32 %v240, %v247
    %249 = vst [vmem:[%s4] sm:$0xff] %v248
  $region17: #{bce_dice_loss.1} parent=0 // pred_fallthru
    _
  %p250 = scmp.gt.s32.totalorder %s75, 2048
  // Predicated region
  $region18: #{bce_dice_loss.1} parent=0 // pred_check
    %p251 = pneg %p250
  $region19: #{bce_dice_loss.1} parent=0 // pred_check_branch
    %253 = sbr.rel (%p251) target = $region21
  $region20: #{bce_dice_loss.1} parent=0 // pred_region
    %v254 = vlaneseq
    %v255 = vshrl.u32 %v254, 7
    %v256 = vadd.s32 %v255, 8
    %v257 = vadd.s32 %v255, 16
    %v258 = vadd.s32 %v255, 24
    %v259 = vlaneseq
    %v260 = vand.u32 %v259, 127
    %v261 = vmul.u32 %v255, 128
    %v262 = vmul.u32 %v256, 128
    %v263 = vmul.u32 %v257, 128
    %v264 = vmul.u32 %v258, 128
    %v265 = vstv %s74
    %v266 = vadd.s32 %v265, %v261
    %v267 = vadd.s32 %v265, %v262
    %v268 = vadd.s32 %v265, %v263
    %v269 = vadd.s32 %v265, %v264
    %v270 = vadd.s32 %v266, %v260
    %v271 = vadd.s32 %v267, %v260
    %v272 = vadd.s32 %v268, %v260
    %v273 = vadd.s32 %v269, %v260
    %vm274 = vcmp.lt.s32.totalorder %v270, 2048
    %vm275 = vcmp.lt.s32.totalorder %v271, 2048
    %vm276 = vcmp.lt.s32.totalorder %v272, 2048
    %vm277 = vcmp.lt.s32.totalorder %v273, 2048
    %v278 = vand.u32 2147483647, %v65
    %v279 = vand.u32 2147483647, %v66
    %v280 = vand.u32 2147483647, %v67
    %v281 = vand.u32 2147483647, %v68
    %v282 = vsub.f32 0.0, %v278
    %v283 = vsub.f32 0.0, %v279
    %v284 = vsub.f32 0.0, %v280
    %v285 = vsub.f32 0.0, %v281
    %v286 = vmul.f32 %v282, 1.442695
    %v287 = vpow.pop %v286
    %v288 = vmul.f32 %v283, 1.442695
    %v289 = vpow.pop %v288
    %v290 = vmul.f32 %v284, 1.442695
    %v291 = vpow.pop %v290
    %v292 = vmul.f32 %v285, 1.442695
    %v293 = vpow.pop %v292
    %v294 = vadd.f32 %v287, 1.0
    %v295 = vlog2.pop %v294
    %v296 = vmul.f32 %v295, 0.6931472
    %v297 = vmul.f32 -0.5, %v287
    %v298 = vadd.f32 %v297, 1.0
    %v299 = vmul.f32 %v298, %v287
    %v300 = vand.u32 2147483647, %v287
    %vm301 = vcmp.lt.f32.partialorder %v300, 0.0004427343
    %v302 = vsel %vm301, %v299, %v296
    %v303 = vadd.f32 %v289, 1.0
    %v304 = vlog2.pop %v303
    %v305 = vmul.f32 %v304, 0.6931472
    %v306 = vmul.f32 -0.5, %v289
    %v307 = vadd.f32 %v306, 1.0
    %v308 = vmul.f32 %v307, %v289
    %v309 = vand.u32 2147483647, %v289
    %vm310 = vcmp.lt.f32.partialorder %v309, 0.0004427343
    %v311 = vsel %vm310, %v308, %v305
    %v312 = vadd.f32 %v291, 1.0
    %v313 = vlog2.pop %v312
    %v314 = vmul.f32 %v313, 0.6931472
    %v315 = vmul.f32 -0.5, %v291
    %v316 = vadd.f32 %v315, 1.0
    %v317 = vmul.f32 %v316, %v291
    %v318 = vand.u32 2147483647, %v291
    %vm319 = vcmp.lt.f32.partialorder %v318, 0.0004427343
    %v320 = vsel %vm319, %v317, %v314
    %v321 = vadd.f32 %v293, 1.0
    %v322 = vlog2.pop %v321
    %v323 = vmul.f32 %v322, 0.6931472
    %v324 = vmul.f32 -0.5, %v293
    %v325 = vadd.f32 %v324, 1.0
    %v326 = vmul.f32 %v325, %v293
    %v327 = vand.u32 2147483647, %v293
    %vm328 = vcmp.lt.f32.partialorder %v327, 0.0004427343
    %v329 = vsel %vm328, %v326, %v323
    %v330 = vadd.f32 %v287, 1.0
    %v331 = vadd.f32 %v289, 1.0
    %v332 = vadd.f32 %v291, 1.0
    %v333 = vadd.f32 %v293, 1.0
    %v334 = vrcp.pop %v330
    %v335 = vmul.f32 %v330, %v334
    %v336 = vsub.f32 1.0, %v335
    %v337 = vmul.f32 %v334, %v336
    %v338 = vadd.f32 %v334, %v337
    %vm339 = vweird.f32 %v330
    %vm340 = vweird.f32 %v334
    %vm341 = vmor %vm339, %vm340
    %v342 = vsel %vm341, %v334, %v338
    %v343 = vand.u32 2147483647, %v330
    %vm344 = vcmp.eq.f32.partialorder %v343, 8.507059e+37
    %v345 = vand.u32 %v330, 2147483648
    %v346 = vor.u32 1.1754944e-38, %v345
    %v347 = vsel %vm344, %v346, %v342
    %v348 = vmul.f32 1.0, %v347
    %v349 = vrcp.pop %v331
    %v350 = vmul.f32 %v331, %v349
    %v351 = vsub.f32 1.0, %v350
    %v352 = vmul.f32 %v349, %v351
    %v353 = vadd.f32 %v349, %v352
    %vm354 = vweird.f32 %v331
    %vm355 = vweird.f32 %v349
    %vm356 = vmor %vm354, %vm355
    %v357 = vsel %vm356, %v349, %v353
    %v358 = vand.u32 2147483647, %v331
    %vm359 = vcmp.eq.f32.partialorder %v358, 8.507059e+37
    %v360 = vand.u32 %v331, 2147483648
    %v361 = vor.u32 1.1754944e-38, %v360
    %v362 = vsel %vm359, %v361, %v357
    %v363 = vmul.f32 1.0, %v362
    %v364 = vrcp.pop %v332
    %v365 = vmul.f32 %v332, %v364
    %v366 = vsub.f32 1.0, %v365
    %v367 = vmul.f32 %v364, %v366
    %v368 = vadd.f32 %v364, %v367
    %vm369 = vweird.f32 %v332
    %vm370 = vweird.f32 %v364
    %vm371 = vmor %vm369, %vm370
    %v372 = vsel %vm371, %v364, %v368
    %v373 = vand.u32 2147483647, %v332
    %vm374 = vcmp.eq.f32.partialorder %v373, 8.507059e+37
    %v375 = vand.u32 %v332, 2147483648
    %v376 = vor.u32 1.1754944e-38, %v375
    %v377 = vsel %vm374, %v376, %v372
    %v378 = vmul.f32 1.0, %v377
    %v379 = vrcp.pop %v333
    %v380 = vmul.f32 %v333, %v379
    %v381 = vsub.f32 1.0, %v380
    %v382 = vmul.f32 %v379, %v381
    %v383 = vadd.f32 %v379, %v382
    %vm384 = vweird.f32 %v333
    %vm385 = vweird.f32 %v379
    %vm386 = vmor %vm384, %vm385
    %v387 = vsel %vm386, %v379, %v383
    %v388 = vand.u32 2147483647, %v333
    %vm389 = vcmp.eq.f32.partialorder %v388, 8.507059e+37
    %v390 = vand.u32 %v333, 2147483648
    %v391 = vor.u32 1.1754944e-38, %v390
    %v392 = vsel %vm389, %v391, %v387
    %v393 = vmul.f32 1.0, %v392
    %vm394 = vcmp.ge.f32.partialorder %v65, 0.0
    %vm395 = vcmp.ge.f32.partialorder %v66, 0.0
    %vm396 = vcmp.ge.f32.partialorder %v67, 0.0
    %vm397 = vcmp.ge.f32.partialorder %v68, 0.0
    %v398 = vsel %vm394, 1.0, %v287
    %v399 = vsel %vm395, 1.0, %v289
    %v400 = vsel %vm396, 1.0, %v291
    %v401 = vsel %vm397, 1.0, %v293
    %v402 = vmul.f32 %v398, %v348
    %v403 = vmul.f32 %v399, %v363
    %v404 = vmul.f32 %v400, %v378
    %v405 = vmul.f32 %v401, %v393
    %v406 = vmax.f32 %v65, 0.0
    %v407 = vmax.f32 %v66, 0.0
    %v408 = vmax.f32 %v67, 0.0
    %v409 = vmax.f32 %v68, 0.0
    %v410 = vmul.f32 %v65, %v69
    %v411 = vmul.f32 %v66, %v70
    %v412 = vmul.f32 %v67, %v71
    %v413 = vmul.f32 %v68, %v72
    %v414 = vsub.f32 %v406, %v410
    %v415 = vsub.f32 %v407, %v411
    %v416 = vsub.f32 %v408, %v412
    %v417 = vsub.f32 %v409, %v413
    %v418 = vadd.f32 %v414, %v302
    %v419 = vadd.f32 %v415, %v311
    %v420 = vadd.f32 %v416, %v320
    %v421 = vadd.f32 %v417, %v329
    %v422 = vsel %vm274, %v418, 0.0
    %v423 = vsel %vm275, %v419, 0.0
    %v424 = vsel %vm276, %v420, 0.0
    %v425 = vsel %vm277, %v421, 0.0
    %v426 = vsel %vm274, %v402, 0.0
    %v427 = vsel %vm275, %v403, 0.0
    %v428 = vsel %vm276, %v404, 0.0
    %v429 = vsel %vm277, %v405, 0.0
    %v430 = vsel %vm274, %v69, 0.0
    %v431 = vsel %vm275, %v70, 0.0
    %v432 = vsel %vm276, %v71, 0.0
    %v433 = vsel %vm277, %v72, 0.0
    %v434 = vld [vmem:[%s2] sm:$0xff]
    %v435 = vadd.f32 %v422, %v423
    %v436 = vadd.f32 %v435, %v424
    %v437 = vadd.f32 %v436, %v425
    %v438 = vadd.f32 %v434, %v437
    %439 = vst [vmem:[%s2] sm:$0xff] %v438
    %v440 = vld [vmem:[%s3] sm:$0xff]
    %v441 = vmul.f32 %v426, %v430
    %v442 = vmul.f32 %v427, %v431
    %v443 = vmul.f32 %v428, %v432
    %v444 = vmul.f32 %v429, %v433
    %v445 = vadd.f32 %v441, %v442
    %v446 = vadd.f32 %v445, %v443
    %v447 = vadd.f32 %v446, %v444
    %v448 = vadd.f32 %v440, %v447
    %449 = vst [vmem:[%s3] sm:$0xff] %v448
    %v450 = vld [vmem:[%s4] sm:$0xff]
    %v451 = vadd.f32 %v426, %v430
    %v452 = vadd.f32 %v427, %v431
    %v453 = vadd.f32 %v428, %v432
    %v454 = vadd.f32 %v429, %v433
    %v455 = vadd.f32 %v451, %v452
    %v456 = vadd.f32 %v455, %v453
    %v457 = vadd.f32 %v456, %v454
    %v458 = vadd.f32 %v450, %v457
    %459 = vst [vmem:[%s4] sm:$0xff] %v458
  $region21: #{bce_dice_loss.1} parent=0 // pred_fallthru
    _
  // Predicated region
  $region22: #{bce_dice_loss.1} parent=0 // pred_check
    _
  $region23: #{bce_dice_loss.1} parent=0 // pred_check_branch
    %461 = sbr.rel (0) target = $region25
  $region24: #{bce_dice_loss.1} parent=0 // pred_region
    _
  $region25: #{bce_dice_loss.1} parent=0 // pred_fallthru
    _
  // Predicated region
  $region26: #{bce_dice_loss.1} parent=0 // pred_check
    _
  $region27: #{bce_dice_loss.1} parent=0 // pred_check_branch
    %463 = sbr.rel (0) target = $region29
  $region28: #{bce_dice_loss.1} parent=0 // pred_region
    _
  $region29: #{bce_dice_loss.1} parent=0 // pred_fallthru
    _
  // Predicated region
  $region30: #{bce_dice_loss.1} parent=0 // pred_check
    _
  $region31: #{bce_dice_loss.1} parent=0 // pred_check_branch
    %465 = sbr.rel (0) target = $region33
  $region32: #{bce_dice_loss.1} parent=0 // pred_region
    _
  $region33: #{bce_dice_loss.1} parent=0 // pred_fallthru
    _
  // Predicated region
  $region34: #{bce_dice_loss.1} parent=0 // pred_check
    _
  $region35: #{bce_dice_loss.1} parent=0 // pred_check_branch
    %467 = sbr.rel (0) target = $region37
  $region36: #{bce_dice_loss.1} parent=0 // pred_region
    _
  $region37: #{bce_dice_loss.1} parent=0 // pred_fallthru
    _
  // Predicated region
  $region38: #{bce_dice_loss.1} parent=0 // pred_check
    _
  $region39: #{bce_dice_loss.1} parent=0 // pred_check_branch
    %469 = sbr.rel (0) target = $region41
  $region40: #{bce_dice_loss.1} parent=0 // pred_region
    _
  $region41: #{bce_dice_loss.1} parent=0 // pred_fallthru
    _
  // Predicated region
  $region42: #{bce_dice_loss.1} parent=0 // pred_check
    _
  $region43: #{bce_dice_loss.1} parent=0 // pred_check_branch
    %471 = sbr.rel (0) target = $region45
  $region44: #{bce_dice_loss.1} parent=0 // pred_region
    _
  $region45: #{bce_dice_loss.1} parent=0 // pred_fallthru
    _

</llo_original>
